<compile_context>
chip_gen: v7x
topology: tpu7x:2x2x1
jax: 0.10.0
libtpu: 0.0.40
codegen_flags: <defaults>
</compile_context>

<pallas_src>
import functools

import jax
import jax.numpy as jnp
import numpy as np
from jax.experimental import pallas as pl
from jax.experimental.pallas import tpu as pltpu

_LANES = 128


def _round_up(x, m):
    return ((x + m - 1) // m) * m


def _neg_half_sumsq_kernel(x_ref, o_ref, acc_ref, *, d, tile_d, mask_tail):
    """Per-row -0.5*sum(x^2) with a lane-wide accumulator over the D grid axis."""
    k = pl.program_id(1)  # reduction axis (last grid axis)

    @pl.when(k == 0)
    def _():
        acc_ref[...] = jnp.zeros_like(acc_ref)

    x = x_ref[...].astype(jnp.float32)  # (TB, TD)
    if mask_tail:
        # Zero the overhang of the last (ragged) D tile in-kernel instead of
        # materializing a padded copy of x in HBM.
        col = k * tile_d + jax.lax.broadcasted_iota(jnp.int32, x.shape, 1)
        x = jnp.where(col < d, x, 0.0)

    # Lane-wise accumulation: static unrolled loop over 128-lane groups keeps
    # the hot loop on full-width VPU ops; no per-step cross-lane reduce.
    acc = acc_ref[...]
    for g in range(tile_d // _LANES):
        xs = x[:, g * _LANES:(g + 1) * _LANES]
        acc = acc + xs * xs
    acc_ref[...] = acc

    @pl.when(k == pl.num_programs(1) - 1)
    def _():
        ss = jnp.sum(acc_ref[...], axis=-1, keepdims=True)  # single XLU reduce
        o_ref[...] = (-0.5 * ss).astype(o_ref.dtype)


def _neg_half_sumsq(x2d):
    """-0.5 * sum(x**2, axis=-1) for a 2-D [rows, d] array via Pallas."""
    rows, d = int(x2d.shape[0]), int(x2d.shape[1])
    tile_d = min(_round_up(max(d, 1), _LANES), 2048)
    tile_b = min(_round_up(max(rows, 1), 8), 256)
    grid = (pl.cdiv(rows, tile_b), pl.cdiv(d, tile_d))
    mask_tail = (d % tile_d) != 0

    kernel = functools.partial(
        _neg_half_sumsq_kernel, d=d, tile_d=tile_d, mask_tail=mask_tail)

    out = pl.pallas_call(
        kernel,
        out_shape=jax.ShapeDtypeStruct((rows, 1), jnp.float32),
        grid_spec=pltpu.PrefetchScalarGridSpec(
            num_scalar_prefetch=0,
            grid=grid,
            in_specs=[pl.BlockSpec((tile_b, tile_d), lambda b, k: (b, k))],
            out_specs=pl.BlockSpec((tile_b, 1), lambda b, k: (b, 0)),
            scratch_shapes=[pltpu.VMEM((tile_b, _LANES), jnp.float32)],
        ),
        compiler_params=pltpu.CompilerParams(
            dimension_semantics=("parallel", "arbitrary")),
        cost_estimate=pl.CostEstimate(
            flops=2 * rows * d,
            transcendentals=0,
            bytes_accessed=int(x2d.dtype.itemsize) * rows * d + 4 * rows),
    )(x2d)
    return jnp.squeeze(out, axis=-1)


def _choose_fold(batch, d):
    """Smallest s with s | d and (batch*s) % 8 == 0 to fill sublanes for tiny batch."""
    if batch >= 8 or d <= 1:
        return 1
    for s in range(2, min(d, 64) + 1):
        if d % s == 0 and (batch * s) % 8 == 0:
            return s
    return 1


class StandardNormal:
    """JAX/Pallas port of the PyTorch StandardNormal distribution."""

    def __init__(self, shape):
        self._shape = tuple(int(s) for s in shape)
        self._log_z = float(0.5 * np.prod(self._shape) * np.log(2 * np.pi))

    # forward() raises by design in the PyTorch module; log_prob is the hot path.

    def log_prob(self, inputs, context=None):
        inputs = jnp.asarray(inputs)
        if context is not None:
            context = jnp.asarray(context)
            if inputs.shape[0] != context.shape[0]:
                raise ValueError(
                    'Number of input items must be equal to number of context items.')
        return self._log_prob(inputs, context)

    def _log_prob(self, inputs, context):
        if tuple(inputs.shape[1:]) != self._shape:
            raise ValueError('Expected input of shape {}, got {}'.format(
                self._shape, inputs.shape[1:]))

        batch = int(inputs.shape[0])
        d = int(np.prod(self._shape)) if len(self._shape) > 0 else 1
        x2d = jnp.reshape(inputs, (batch, d))

        # Sublane packing for tiny batches: (B, D) -> (B*s, D/s) is a
        # contiguous (free) reshape; per-fold partial sums are recombined below.
        s = _choose_fold(batch, d)
        if s > 1:
            x2d = jnp.reshape(x2d, (batch * s, d // s))

        neg_half_ss = _neg_half_sumsq(x2d)            # (batch*s,)
        if s > 1:
            neg_half_ss = jnp.sum(jnp.reshape(neg_half_ss, (batch, s)), axis=-1)
        return neg_half_ss - jnp.float32(self._log_z)

    def mean(self, context=None):
        if context is None:
            return jnp.zeros(self._shape, dtype=jnp.float32)
        context = jnp.asarray(context)
        return jnp.zeros((context.shape[0],) + self._shape, dtype=jnp.float32)

    # TODO(synk): sampling (torch.randn) is left in plain JAX — RNG glue, not a kernel hot path.
    def sample(self, num_samples, key, context=None):
        if context is None:
            return jax.random.normal(key, (num_samples,) + self._shape,
                                     dtype=jnp.float32)
        context = jnp.asarray(context)
        return jax.random.normal(
            key, (context.shape[0], num_samples) + self._shape, dtype=jnp.float32)


def _ref_log_prob(x, event_shape):
    b = x.shape[0]
    return (-0.5 * jnp.sum(jnp.reshape(x, (b, -1)).astype(jnp.float32) ** 2, axis=1)
            - 0.5 * np.prod(event_shape) * np.log(2 * np.pi))


if __name__ == "__main__":
    key = jax.random.PRNGKey(0)

    # Primary demo: image-like event shape (C, H, W) = (4, 16, 16), batch = 2
    # (exercises the small-batch sublane-fold path: (2, 1024) -> (8, 256)).
    event_shape = (4, 16, 16)
    batch = 2
    k0, k1, k2 = jax.random.split(key, 3)
    x = jax.random.normal(k0, (batch,) + event_shape, dtype=jnp.float32)

    dist = StandardNormal(event_shape)
    lp = jax.block_until_ready(dist.log_prob(x))
    np.testing.assert_allclose(np.asarray(lp),
                               np.asarray(_ref_log_prob(x, event_shape)),
                               rtol=1e-5, atol=1e-5)

    # Extra check: ragged D (not a multiple of 128), no fold (batch >= 8).
    es2 = (5, 7)
    x2 = jax.random.normal(k1, (16,) + es2, dtype=jnp.float32)
    lp2 = jax.block_until_ready(StandardNormal(es2).log_prob(x2))
    np.testing.assert_allclose(np.asarray(lp2),
                               np.asarray(_ref_log_prob(x2, es2)),
                               rtol=1e-5, atol=1e-5)

    # Extra check: D > tile (multiple reduction grid steps) with ragged tail.
    es3 = (2100,)
    x3 = jax.random.normal(k2, (16,) + es3, dtype=jnp.float32)
    lp3 = jax.block_until_ready(StandardNormal(es3).log_prob(x3))
    np.testing.assert_allclose(np.asarray(lp3),
                               np.asarray(_ref_log_prob(x3, es3)),
                               rtol=1e-5, atol=1e-5)

    print("KERNEL_OK")
</pallas_src>

<mosaic_0001>
module attributes {stable_mosaic.version = 11 : i64} {
  func.func @_neg_half_sumsq_kernel(%arg0: i32, %arg1: i32, %arg2: memref<8x256xf32, #tpu.memory_space<vmem>>, %arg3: memref<8x1xf32, #tpu.memory_space<vmem>>, %arg4: memref<8x128xf32, #tpu.memory_space<vmem>>) attributes {dimension_semantics = [#tpu.dimension_semantics<parallel>, #tpu.dimension_semantics<arbitrary>], iteration_bounds = array<i64: 1, 1>, scalar_prefetch = 0 : i64, scratch_operands = 1 : i64, tpu.core_type = #tpu.core_type<tc>, window_params = [{transform_indices = @transform_0, window_bounds = array<i64: 8, 256>}, {transform_indices = @transform_1, window_bounds = array<i64: 8, 1>}]} {
    %c0_i32 = arith.constant 0 : i32
    %0 = arith.cmpi eq, %arg1, %c0_i32 : i32
    %1 = arith.extui %0 : i1 to i32
    %c0_i32_0 = arith.constant 0 : i32
    %2 = arith.cmpi ne, %1, %c0_i32_0 : i32
    scf.if %2 {
      %cst = arith.constant 0.000000e+00 : f32
      %15 = vector.broadcast %cst : f32 to vector<8x128xf32>
      %c0_8 = arith.constant 0 : index
      %c0_9 = arith.constant 0 : index
      %16 = vector.load %arg4[%c0_8, %c0_9] : memref<8x128xf32, #tpu.memory_space<vmem>>, vector<8x128xf32>
      tpu.vector_store %arg4[%c0_8, %c0_9], %15 {strides = array<i32>} : memref<8x128xf32, #tpu.memory_space<vmem>>, vector<8x128xf32>,
    } else {
    }
    %c0 = arith.constant 0 : index
    %c0_1 = arith.constant 0 : index
    %3 = vector.load %arg2[%c0, %c0_1] : memref<8x256xf32, #tpu.memory_space<vmem>>, vector<8x256xf32>
    %c0_2 = arith.constant 0 : index
    %c0_3 = arith.constant 0 : index
    %4 = vector.load %arg4[%c0_2, %c0_3] : memref<8x128xf32, #tpu.memory_space<vmem>>, vector<8x128xf32>
    %5 = vector.extract_strided_slice %3 {offsets = [0, 0], sizes = [8, 128], strides = [1, 1]} : vector<8x256xf32> to vector<8x128xf32>
    %6 = arith.mulf %5, %5 : vector<8x128xf32>
    %7 = arith.addf %4, %6 : vector<8x128xf32>
    %8 = vector.extract_strided_slice %3 {offsets = [0, 128], sizes = [8, 128], strides = [1, 1]} : vector<8x256xf32> to vector<8x128xf32>
    %9 = arith.mulf %8, %8 : vector<8x128xf32>
    %10 = arith.addf %7, %9 : vector<8x128xf32>
    %c0_4 = arith.constant 0 : index
    %c0_5 = arith.constant 0 : index
    %11 = vector.load %arg4[%c0_4, %c0_5] : memref<8x128xf32, #tpu.memory_space<vmem>>, vector<8x128xf32>
    tpu.vector_store %arg4[%c0_4, %c0_5], %10 {strides = array<i32>} : memref<8x128xf32, #tpu.memory_space<vmem>>, vector<8x128xf32>,
    %c0_i32_6 = arith.constant 0 : i32
    %12 = arith.cmpi eq, %arg1, %c0_i32_6 : i32
    %13 = arith.extui %12 : i1 to i32
    %c0_i32_7 = arith.constant 0 : i32
    %14 = arith.cmpi ne, %13, %c0_i32_7 : i32
    scf.if %14 {
      %c0_8 = arith.constant 0 : index
      %c0_9 = arith.constant 0 : index
      %15 = vector.load %arg4[%c0_8, %c0_9] : memref<8x128xf32, #tpu.memory_space<vmem>>, vector<8x128xf32>
      %cst = arith.constant dense<0.000000e+00> : vector<8xf32>
      %16 = vector.multi_reduction <add>, %15, %cst [1] : vector<8x128xf32> to vector<8xf32>
      %17 = vector.shape_cast %16 : vector<8xf32> to vector<8x1xf32>
      %cst_10 = arith.constant -5.000000e-01 : f32
      %18 = vector.broadcast %cst_10 : f32 to vector<8x1xf32>
      %19 = arith.mulf %18, %17 : vector<8x1xf32>
      %c0_11 = arith.constant 0 : index
      %c0_12 = arith.constant 0 : index
      %20 = vector.load %arg3[%c0_11, %c0_12] : memref<8x1xf32, #tpu.memory_space<vmem>>, vector<8x1xf32>
      tpu.vector_store %arg3[%c0_11, %c0_12], %19 {strides = array<i32>} : memref<8x1xf32, #tpu.memory_space<vmem>>, vector<8x1xf32>,
    } else {
    }
    return
  }
  func.func @transform_0(%arg0: i32, %arg1: i32) -> (i32, i32) {
    %c0_i32 = arith.constant 0 : i32
    return %arg0, %arg1 : i32, i32
  }
  func.func @transform_1(%arg0: i32, %arg1: i32) -> (i32, i32) {
    %c0_i32 = arith.constant 0 : i32
    %c0_i32_0 = arith.constant 0 : i32
    return %arg0, %c0_i32 : i32, i32
  }
}

</mosaic_0001>

<llo_original>
// kernel: tpu_custom_call.1
$region0: #{tpu_custom_call.1}
  #allocation0 [shape = 'u32[]', space=smem, size = 0x4, offset = 0x4, fixed_abs, tag = 'smem constant byte address 0x4 - core index']
  #allocation1 [shape = 'u32[144,128]{1,0:T(1,128)}', space=vmem, size = 0x12000, scoped, tag = 'internal scratch']
  #allocation2 [shape = 'f32[8,128]{1,0:T(8,128)}', space=vmem, size = 0x1000, scoped, tag = 'scratch operand']
  %s0 = inlined_call_operand.hbm [shape: f32[8,256], index: 0, kind: input, shape index: {}]
  %s1 = inlined_call_operand.vmem [shape: f32[8,1], index: 1, kind: output, shape index: {}]
  %s2 = sld [smem:[#allocation0]]
  $region26: #{tpu_custom_call.1} parent=0
    _
  %s4 = ssub.s32 1, %s2
  %s5 = scalar_select 0, %s4, %s2
  $region1: #{tpu_custom_call.1} parent=0
    #allocation3 [shape = 'u8[8192]{0}', space=vmem, size = 0x2000, scoped, tag = 'input window, operand 0, single buffered']
    #allocation4 [shape = 's32[1]{0}', space=sflag, size = 0x4, scoped, tag = 'scoped memory for tpu_custom_call.1']
    %6 = vsyncpa [#allocation4], 0
    // Predicated region
    $region2: #{tpu_custom_call.1} parent=1 // pred_check
      _
    $region3: #{tpu_custom_call.1} parent=1 // pred_check_branch
      %8 = sbr.rel (0) target = $region5
    $region4: #{tpu_custom_call.1} parent=1 // pred_region
      %s10 = ssub.s32 256, 256
      %11 = vsyncadd [#allocation4], %s10
      %s13 = sshll.u32 [#allocation3], 4
      %s14 = int_to_ptr.vmem [resolvable:$true] %s13
      %16 = dma.hbm_to_vmem [thread:$0]  %s0, 256, %s14, [#allocation4]
    $region5: #{tpu_custom_call.1} parent=1 // pred_fallthru
      _
    // Predicated region
    $region6: #{tpu_custom_call.1} parent=1 // pred_check
      _
    $region7: #{tpu_custom_call.1} parent=1 // pred_check_branch
      %18 = sbr.rel (0) target = $region9
    $region8: #{tpu_custom_call.1} parent=1 // pred_region
      %19 = dma.done [#allocation4], 256
    $region9: #{tpu_custom_call.1} parent=1 // pred_fallthru
      _
    %p20 = scmp.eq.s32.totalorder 0, 0
    // Predicated region
    $region10: #{tpu_custom_call.1} parent=1 // pred_check
      %p21 = pneg %p20
    $region11: #{tpu_custom_call.1} parent=1 // pred_check_branch
      %23 = sbr.rel (%p21) target = $region13
    $region12: #{tpu_custom_call.1} parent=1 // pred_region
      %24 = vst [vmem:[#allocation2] sm:$0xff] 0.0
    $region13: #{tpu_custom_call.1} parent=1 // pred_fallthru
      _
    %v25 = vld [vmem:[#allocation3] sm:$0xff]
    %v26 = vld [vmem:[#allocation3 + $0x8] sm:$0xff]
    %v27 = vld [vmem:[#allocation2] sm:$0xff]
    %v28 = vmul.f32 %v25, %v25
    %v29 = vadd.f32 %v27, %v28
    %v30 = vmul.f32 %v26, %v26
    %v31 = vadd.f32 %v29, %v30
    %32 = vst [vmem:[#allocation2] sm:$0xff] %v31
    // Predicated region
    $region14: #{tpu_custom_call.1} parent=1 // pred_check
      %p33 = pneg %p20
    $region15: #{tpu_custom_call.1} parent=1 // pred_check_branch
      %35 = sbr.rel (%p33) target = $region17
    $region16: #{tpu_custom_call.1} parent=1 // pred_region
      %v36 = vld [vmem:[#allocation2] sm:$0xff]
      %37 = vadd.xlane.f32.xlu0 %v36
      %v38 = vpop.xlane.xlu0 %37
      %v39 = vmul.f32 %v38, -0.5
      %vm40 = vcmask 7168
      %41 = vst.msk [vmem:[%s1] sm:$0xff] %vm40, %v39
    $region17: #{tpu_custom_call.1} parent=1 // pred_fallthru
      _
    // Predicated region
    $region18: #{tpu_custom_call.1} parent=1 // pred_check
      _
    $region19: #{tpu_custom_call.1} parent=1 // pred_check_branch
      %43 = sbr.rel (0) target = $region21
    $region20: #{tpu_custom_call.1} parent=1 // pred_region
      _
    $region21: #{tpu_custom_call.1} parent=1 // pred_fallthru
      _
    // Predicated region
    $region22: #{tpu_custom_call.1} parent=1 // pred_check
      _
    $region23: #{tpu_custom_call.1} parent=1 // pred_check_branch
      %45 = sbr.rel (0) target = $region25
    $region24: #{tpu_custom_call.1} parent=1 // pred_region
      _
    $region25: #{tpu_custom_call.1} parent=1 // pred_fallthru
      _
    %46 = vsyncpa [#allocation4], 1

</llo_original>
